<compile_context>
chip_gen: v5e
topology: v5e:2x2
jax: 0.10.0
libtpu: 0.0.40
codegen_flags: <defaults>
</compile_context>

<pallas_src>
import functools

import jax
import jax.numpy as jnp
import numpy as np
from jax.experimental import pallas as pl
from jax.experimental.pallas import tpu as pltpu

NEG_SLOPE = 0.01   # nn.LeakyReLU default
_TM_MAX = 2048     # max pixels per lane tile (multiple of 256; ~0.5 MiB f32 activations)


def _leaky_relu(x):
    return jnp.where(x > 0, x, NEG_SLOPE * x)


# ----------------------------------------------------------------------------
# Fused kernel:  data = G_data(mesh scaled by ctrl),  size = P_size(ctrl)
# Activations are [channels, pixels] (pixels on the lane axis); weights are
# pre-transposed to [out, in], biases are [out, 1].
# ----------------------------------------------------------------------------
def _make_kernel(n_data_layers, n_size_layers):
    def kernel(*refs):
        scale_ref, ctrl_ref, mesh_ref = refs[0], refs[1], refs[2]
        i = 3
        data_wb = refs[i:i + 2 * n_data_layers]
        i += 2 * n_data_layers
        size_wb = refs[i:i + 2 * n_size_layers]
        i += 2 * n_size_layers
        data_out_ref, size_out_ref = refs[i], refs[i + 1]

        # ---- DataGenerator (1x1-conv MLP == per-pixel MLP), pixels on lanes ----
        # mesh[2:, :] *= ctrl[b]  <=>  mesh * scale   (scale rows 0:2 are 1.0)
        h = mesh_ref[...] * scale_ref[0]                       # (C_in, TM)
        for l in range(n_data_layers):
            wt = data_wb[2 * l][...]                           # (out, in)
            bias = data_wb[2 * l + 1][...]                     # (out, 1)
            h = jnp.dot(wt, h, preferred_element_type=jnp.float32) + bias
            if l < n_data_layers - 1:
                h = _leaky_relu(h)                             # VPU
        data_out_ref[0] = h.astype(data_out_ref.dtype)         # lane-dense store

        # ---- SizePredictor (tiny MLP), computed once per batch ----
        @pl.when(pl.program_id(1) == 0)
        def _():
            s = ctrl_ref[0]                                    # (n_ctrl, 1)
            for l in range(n_size_layers):
                wt = size_wb[2 * l][...]
                bias = size_wb[2 * l + 1][...]
                s = jnp.dot(wt, s, preferred_element_type=jnp.float32) + bias
                if l < n_size_layers - 1:
                    s = _leaky_relu(s)
            size_out_ref[0] = s.astype(size_out_ref.dtype)     # (2, 1)

    return kernel


# ----------------------------------------------------------------------------
# FlameGenerator forward (single pallas_call)
# ----------------------------------------------------------------------------
def flame_generator_forward(ctrl, mesh_base, data_params_t, size_params_t):
    """ctrl: [B, n_ctrl] f32;  mesh_base: [1, 2+n_ctrl, H, W] constant buffer.

    data_params_t / size_params_t: lists of (W_T[out, in], b[out, 1]) float32.
    Returns (data [B, data_dim, H, W], size [B, 2]).
    """
    B, n_ctrl = ctrl.shape
    _, C, H, W = mesh_base.shape               # C = 2 + n_ctrl
    npix = H * W
    data_dim = data_params_t[-1][0].shape[0]
    nd, ns = len(data_params_t), len(size_params_t)

    # NCHW + per-pixel matmul => just flatten spatial dims (no transpose).
    mesh_flat = mesh_base.reshape(C, npix).astype(jnp.float32)

    # Lane tile: as large as possible (multiple of 128; 256-multiples feed the full
    # 256-wide v6e/v7x MXU).  Pad the pixel axis so the grid divides evenly; padded
    # lanes are sliced off after the call (no full-array fallback block).
    npix_pad = ((npix + 127) // 128) * 128
    if npix_pad <= _TM_MAX:
        tm = npix_pad
    else:
        tm = _TM_MAX
        npix_pad = ((npix + tm - 1) // tm) * tm
    if npix_pad != npix:
        mesh_flat = jnp.pad(mesh_flat, ((0, 0), (0, npix_pad - npix)))
    n_m = npix_pad // tm

    ctrl = ctrl.astype(jnp.float32)
    # scale[b] = [1, 1, ctrl[b, 0], ..., ctrl[b, n_ctrl-1]] as a column vector.
    ctrl_scale = jnp.concatenate(
        [jnp.ones((B, 2), jnp.float32), ctrl], axis=1)[:, :, None]   # [B, C, 1]
    ctrl_col = ctrl[:, :, None]                                      # [B, n_ctrl, 1]

    in_specs = [
        pl.BlockSpec((1, C, 1), lambda b, m: (b, 0, 0)),        # ctrl scale column
        pl.BlockSpec((1, n_ctrl, 1), lambda b, m: (b, 0, 0)),   # ctrl column (size MLP)
        pl.BlockSpec((C, tm), lambda b, m: (0, m)),             # mesh pixel tile
    ]
    inputs = [ctrl_scale, ctrl_col, mesh_flat]
    # Weights/biases are grid-invariant full blocks (index_map -> (0, 0)): DMA'd once,
    # resident for the whole grid.
    # TODO(synk): could pack all layer weights into one padded VMEM slab to cut
    # BlockSpec bookkeeping further (minor win; skipped for clarity).
    for wt, bias in (*data_params_t, *size_params_t):
        in_specs.append(pl.BlockSpec(wt.shape, lambda b, m: (0, 0)))
        in_specs.append(pl.BlockSpec(bias.shape, lambda b, m: (0, 0)))
        inputs.extend([wt, bias])

    out_shape = (jax.ShapeDtypeStruct((B, data_dim, npix_pad), jnp.float32),
                 jax.ShapeDtypeStruct((B, 2, 1), jnp.float32))
    out_specs = [pl.BlockSpec((1, data_dim, tm), lambda b, m: (b, 0, m)),
                 pl.BlockSpec((1, 2, 1), lambda b, m: (b, 0, 0))]

    data_flat, size_col = pl.pallas_call(
        _make_kernel(nd, ns),
        out_shape=out_shape,
        grid_spec=pltpu.PrefetchScalarGridSpec(
            num_scalar_prefetch=0,
            grid=(B, n_m),
            in_specs=in_specs,
            out_specs=out_specs),
        compiler_params=pltpu.CompilerParams(
            # batch axis parallel (v7x 2-TC sharding); pixel-tile axis arbitrary
            # because the size output block is resident across it.
            dimension_semantics=("parallel", "arbitrary")),
    )(*inputs)

    data = data_flat[:, :, :npix].reshape(B, data_dim, H, W)
    size = size_col[:, :, 0]
    return data, size


# ----------------------------------------------------------------------------
# Mesh construction (plain-JAX glue, mirrors FlameGenerator.create_mesh; runs once)
# ----------------------------------------------------------------------------
def create_mesh(mesh_size, scale, q=1.01):
    h, w = mesh_size
    x_scale, y_scale = scale
    ax = x_scale * (1 - q) / (1 - q ** (w - 1))
    ay = y_scale * (1 - q) / (1 - q ** (h - 1))
    j = jnp.arange(w, dtype=jnp.float32)
    i = jnp.arange(h, dtype=jnp.float32)
    wx = jnp.where(j > 0, ax * (q ** j), 0.0)
    wy = jnp.where(i > 0, ay * (q ** i), 0.0)
    x = jnp.cumsum(wx)                      # [w]
    y = jnp.cumsum(wy)                      # [h]
    mesh_x = jnp.broadcast_to(x[None, :], (h, w))
    mesh_y = jnp.broadcast_to(y[:, None], (h, w))
    return jnp.stack([mesh_x, mesh_y], axis=0)[None]  # [1, 2, h, w]


# ----------------------------------------------------------------------------
# Parameter init (deterministic, synthetic) + kernel-layout prep
# ----------------------------------------------------------------------------
def init_mlp_params(key, dims):
    """dims = [d0, ..., dL]; returns [(W[d_i, d_{i+1}], b[1, d_{i+1}]), ...]."""
    params = []
    for i in range(len(dims) - 1):
        key, kw, kb = jax.random.split(key, 3)
        bound = 1.0 / np.sqrt(dims[i])
        w = jax.random.uniform(kw, (dims[i], dims[i + 1]), jnp.float32, -bound, bound)
        b = jax.random.uniform(kb, (1, dims[i + 1]), jnp.float32, -bound, bound)
        params.append((w, b))
    return params


def prep_mlp_params(params):
    """Math layout (W[in,out], b[1,out]) -> kernel layout (W_T[out,in], b[out,1])."""
    return [(w.T, b.reshape(-1, 1)) for (w, b) in params]


# ----------------------------------------------------------------------------
# Pure-JAX reference
# ----------------------------------------------------------------------------
def _mlp_ref(x, params):
    h = x
    for li, (w, b) in enumerate(params):
        h = h @ w + b
        if li < len(params) - 1:
            h = jnp.where(h > 0, h, NEG_SLOPE * h)
    return h


if __name__ == "__main__":
    cfg = {
        "ctrl": 4,
        "data_hiden": [32, 32],
        "data_dim": 4,
        "size_hiden": [32],
        "mesh_size": [16, 16],
    }
    B = 2
    key = jax.random.PRNGKey(0)
    k_ctrl, k_data, k_size = jax.random.split(key, 3)

    # inputs
    ctrl = jax.random.uniform(k_ctrl, (B, cfg["ctrl"]), jnp.float32, 0.0, 1.0)

    # parameters
    data_dims = [cfg["ctrl"] + 2] + cfg["data_hiden"] + [cfg["data_dim"]]
    size_dims = [cfg["ctrl"]] + cfg["size_hiden"] + [2]
    data_params = init_mlp_params(k_data, data_dims)
    size_params = init_mlp_params(k_size, size_dims)
    data_params_t = prep_mlp_params(data_params)
    size_params_t = prep_mlp_params(size_params)

    # constant mesh buffer  [1, 2+ctrl, H, W]
    H, W = cfg["mesh_size"]
    mesh_base = jnp.ones((1, 2 + cfg["ctrl"], H, W), jnp.float32)
    mesh_base = mesh_base.at[:, 0:2, :, :].multiply(create_mesh((H, W), (2, 2)))

    fwd = jax.jit(functools.partial(flame_generator_forward,
                                    data_params_t=data_params_t,
                                    size_params_t=size_params_t))
    data, size = fwd(ctrl, mesh_base)
    jax.block_until_ready((data, size))

    # reference check (mirrors the PyTorch forward)
    C = 2 + cfg["ctrl"]
    mesh = jnp.broadcast_to(mesh_base, (B, C, H, W))
    mesh = mesh.at[:, 2:, :, :].multiply(ctrl[:, :, None, None])
    mesh_nhwc = jnp.transpose(mesh, (0, 2, 3, 1)).reshape(B * H * W, C)
    data_ref = jnp.transpose(
        _mlp_ref(mesh_nhwc, data_params).reshape(B, H, W, cfg["data_dim"]),
        (0, 3, 1, 2))
    size_ref = _mlp_ref(ctrl, size_params)

    assert data.shape == (B, cfg["data_dim"], H, W)
    assert size.shape == (B, 2)
    np.testing.assert_allclose(np.asarray(data), np.asarray(data_ref),
                               rtol=1e-5, atol=1e-5)
    np.testing.assert_allclose(np.asarray(size), np.asarray(size_ref),
                               rtol=1e-5, atol=1e-5)

    print("KERNEL_OK")
</pallas_src>

<mosaic_0001>
module attributes {stable_mosaic.version = 11 : i64} {
  func.func @kernel(%arg0: i32, %arg1: i32, %arg2: memref<1x6x1xf32, #tpu.memory_space<vmem>>, %arg3: memref<1x4x1xf32, #tpu.memory_space<vmem>>, %arg4: memref<6x256xf32, #tpu.memory_space<vmem>>, %arg5: memref<32x6xf32, #tpu.memory_space<vmem>>, %arg6: memref<32x1xf32, #tpu.memory_space<vmem>>, %arg7: memref<32x32xf32, #tpu.memory_space<vmem>>, %arg8: memref<32x1xf32, #tpu.memory_space<vmem>>, %arg9: memref<4x32xf32, #tpu.memory_space<vmem>>, %arg10: memref<4x1xf32, #tpu.memory_space<vmem>>, %arg11: memref<32x4xf32, #tpu.memory_space<vmem>>, %arg12: memref<32x1xf32, #tpu.memory_space<vmem>>, %arg13: memref<2x32xf32, #tpu.memory_space<vmem>>, %arg14: memref<2x1xf32, #tpu.memory_space<vmem>>, %arg15: memref<1x4x256xf32, #tpu.memory_space<vmem>>, %arg16: memref<1x2x1xf32, #tpu.memory_space<vmem>>) attributes {dimension_semantics = [#tpu.dimension_semantics<parallel>, #tpu.dimension_semantics<arbitrary>], iteration_bounds = array<i64: 2, 1>, scalar_prefetch = 0 : i64, scratch_operands = 0 : i64, tpu.core_type = #tpu.core_type<tc>, window_params = [{transform_indices = @transform_0, window_bounds = array<i64: 1, 6, 1>}, {transform_indices = @transform_1, window_bounds = array<i64: 1, 4, 1>}, {transform_indices = @transform_2, window_bounds = array<i64: 6, 256>}, {pipeline_mode = #tpu.pipeline_mode<synchronous>, transform_indices = @transform_3, window_bounds = array<i64: 32, 6>}, {pipeline_mode = #tpu.pipeline_mode<synchronous>, transform_indices = @transform_4, window_bounds = array<i64: 32, 1>}, {pipeline_mode = #tpu.pipeline_mode<synchronous>, transform_indices = @transform_5, window_bounds = array<i64: 32, 32>}, {pipeline_mode = #tpu.pipeline_mode<synchronous>, transform_indices = @transform_6, window_bounds = array<i64: 32, 1>}, {pipeline_mode = #tpu.pipeline_mode<synchronous>, transform_indices = @transform_7, window_bounds = array<i64: 4, 32>}, {pipeline_mode = #tpu.pipeline_mode<synchronous>, transform_indices = @transform_8, window_bounds = array<i64: 4, 1>}, {pipeline_mode = #tpu.pipeline_mode<synchronous>, transform_indices = @transform_9, window_bounds = array<i64: 32, 4>}, {pipeline_mode = #tpu.pipeline_mode<synchronous>, transform_indices = @transform_10, window_bounds = array<i64: 32, 1>}, {pipeline_mode = #tpu.pipeline_mode<synchronous>, transform_indices = @transform_11, window_bounds = array<i64: 2, 32>}, {pipeline_mode = #tpu.pipeline_mode<synchronous>, transform_indices = @transform_12, window_bounds = array<i64: 2, 1>}, {transform_indices = @transform_13, window_bounds = array<i64: 1, 4, 256>}, {transform_indices = @transform_14, window_bounds = array<i64: 1, 2, 1>}]} {
    %c0 = arith.constant 0 : index
    %c0_0 = arith.constant 0 : index
    %0 = vector.load %arg4[%c0, %c0_0] : memref<6x256xf32, #tpu.memory_space<vmem>>, vector<6x256xf32>
    %c0_1 = arith.constant 0 : index
    %c0_2 = arith.constant 0 : index
    %c0_3 = arith.constant 0 : index
    %1 = vector.load %arg2[%c0_1, %c0_2, %c0_3] : memref<1x6x1xf32, #tpu.memory_space<vmem>>, vector<1x6x1xf32>
    %2 = vector.shape_cast %1 : vector<1x6x1xf32> to vector<6x1xf32>
    %3 = vector.broadcast %2 : vector<6x1xf32> to vector<6x256xf32>
    %4 = arith.mulf %0, %3 : vector<6x256xf32>
    %c0_4 = arith.constant 0 : index
    %c0_5 = arith.constant 0 : index
    %5 = vector.load %arg5[%c0_4, %c0_5] : memref<32x6xf32, #tpu.memory_space<vmem>>, vector<32x6xf32>
    %c0_6 = arith.constant 0 : index
    %c0_7 = arith.constant 0 : index
    %6 = vector.load %arg6[%c0_6, %c0_7] : memref<32x1xf32, #tpu.memory_space<vmem>>, vector<32x1xf32>
    %cst = arith.constant dense<0.000000e+00> : vector<32x256xf32>
    %7 = tpu.matmul %5, %4, %cst {dimension_numbers = #tpu.dot_dimension_numbers<[1], [0], [0], [1], [0, 0, 1, 1], [], []>} : vector<32x6xf32>, vector<6x256xf32>, vector<32x256xf32> -> vector<32x256xf32>
    %8 = vector.broadcast %6 : vector<32x1xf32> to vector<32x256xf32>
    %9 = arith.addf %7, %8 : vector<32x256xf32>
    %cst_8 = arith.constant 0.000000e+00 : f32
    %10 = vector.broadcast %cst_8 : f32 to vector<32x256xf32>
    %11 = arith.cmpf ogt, %9, %10 : vector<32x256xf32>
    %cst_9 = arith.constant 0.00999999977 : f32
    %12 = vector.broadcast %cst_9 : f32 to vector<32x256xf32>
    %13 = arith.mulf %12, %9 : vector<32x256xf32>
    %14 = arith.select %11, %9, %13 : vector<32x256xi1>, vector<32x256xf32>
    %c0_10 = arith.constant 0 : index
    %c0_11 = arith.constant 0 : index
    %15 = vector.load %arg7[%c0_10, %c0_11] : memref<32x32xf32, #tpu.memory_space<vmem>>, vector<32x32xf32>
    %c0_12 = arith.constant 0 : index
    %c0_13 = arith.constant 0 : index
    %16 = vector.load %arg8[%c0_12, %c0_13] : memref<32x1xf32, #tpu.memory_space<vmem>>, vector<32x1xf32>
    %cst_14 = arith.constant dense<0.000000e+00> : vector<32x256xf32>
    %17 = tpu.matmul %15, %14, %cst_14 {dimension_numbers = #tpu.dot_dimension_numbers<[1], [0], [0], [1], [0, 0, 1, 1], [], []>} : vector<32x32xf32>, vector<32x256xf32>, vector<32x256xf32> -> vector<32x256xf32>
    %18 = vector.broadcast %16 : vector<32x1xf32> to vector<32x256xf32>
    %19 = arith.addf %17, %18 : vector<32x256xf32>
    %cst_15 = arith.constant 0.000000e+00 : f32
    %20 = vector.broadcast %cst_15 : f32 to vector<32x256xf32>
    %21 = arith.cmpf ogt, %19, %20 : vector<32x256xf32>
    %cst_16 = arith.constant 0.00999999977 : f32
    %22 = vector.broadcast %cst_16 : f32 to vector<32x256xf32>
    %23 = arith.mulf %22, %19 : vector<32x256xf32>
    %24 = arith.select %21, %19, %23 : vector<32x256xi1>, vector<32x256xf32>
    %c0_17 = arith.constant 0 : index
    %c0_18 = arith.constant 0 : index
    %25 = vector.load %arg9[%c0_17, %c0_18] : memref<4x32xf32, #tpu.memory_space<vmem>>, vector<4x32xf32>
    %c0_19 = arith.constant 0 : index
    %c0_20 = arith.constant 0 : index
    %26 = vector.load %arg10[%c0_19, %c0_20] : memref<4x1xf32, #tpu.memory_space<vmem>>, vector<4x1xf32>
    %cst_21 = arith.constant dense<0.000000e+00> : vector<4x256xf32>
    %27 = tpu.matmul %25, %24, %cst_21 {dimension_numbers = #tpu.dot_dimension_numbers<[1], [0], [0], [1], [0, 0, 1, 1], [], []>} : vector<4x32xf32>, vector<32x256xf32>, vector<4x256xf32> -> vector<4x256xf32>
    %28 = vector.broadcast %26 : vector<4x1xf32> to vector<4x256xf32>
    %29 = arith.addf %27, %28 : vector<4x256xf32>
    %c0_22 = arith.constant 0 : index
    %c0_23 = arith.constant 0 : index
    %c0_24 = arith.constant 0 : index
    %30 = vector.load %arg15[%c0_22, %c0_23, %c0_24] : memref<1x4x256xf32, #tpu.memory_space<vmem>>, vector<1x4x256xf32>
    %31 = vector.shape_cast %30 : vector<1x4x256xf32> to vector<4x256xf32>
    %32 = vector.shape_cast %29 : vector<4x256xf32> to vector<1x4x256xf32>
    tpu.vector_store %arg15[%c0_22, %c0_23, %c0_24], %32 {strides = array<i32>} : memref<1x4x256xf32, #tpu.memory_space<vmem>>, vector<1x4x256xf32>,
    %c0_i32 = arith.constant 0 : i32
    %33 = arith.cmpi eq, %arg1, %c0_i32 : i32
    %34 = arith.extui %33 : i1 to i32
    %c0_i32_25 = arith.constant 0 : i32
    %35 = arith.cmpi ne, %34, %c0_i32_25 : i32
    scf.if %35 {
      %c0_26 = arith.constant 0 : index
      %c0_27 = arith.constant 0 : index
      %c0_28 = arith.constant 0 : index
      %36 = vector.load %arg3[%c0_26, %c0_27, %c0_28] : memref<1x4x1xf32, #tpu.memory_space<vmem>>, vector<1x4x1xf32>
      %37 = vector.shape_cast %36 : vector<1x4x1xf32> to vector<4x1xf32>
      %c0_29 = arith.constant 0 : index
      %c0_30 = arith.constant 0 : index
      %38 = vector.load %arg11[%c0_29, %c0_30] : memref<32x4xf32, #tpu.memory_space<vmem>>, vector<32x4xf32>
      %c0_31 = arith.constant 0 : index
      %c0_32 = arith.constant 0 : index
      %39 = vector.load %arg12[%c0_31, %c0_32] : memref<32x1xf32, #tpu.memory_space<vmem>>, vector<32x1xf32>
      %cst_33 = arith.constant dense<0.000000e+00> : vector<32x1xf32>
      %40 = tpu.matmul %38, %37, %cst_33 {dimension_numbers = #tpu.dot_dimension_numbers<[1], [0], [0], [1], [0, 0, 1, 1], [], []>} : vector<32x4xf32>, vector<4x1xf32>, vector<32x1xf32> -> vector<32x1xf32>
      %41 = arith.addf %40, %39 : vector<32x1xf32>
      %cst_34 = arith.constant 0.000000e+00 : f32
      %42 = vector.broadcast %cst_34 : f32 to vector<32x1xf32>
      %43 = arith.cmpf ogt, %41, %42 : vector<32x1xf32>
      %cst_35 = arith.constant 0.00999999977 : f32
      %44 = vector.broadcast %cst_35 : f32 to vector<32x1xf32>
      %45 = arith.mulf %44, %41 : vector<32x1xf32>
      %46 = arith.select %43, %41, %45 : vector<32x1xi1>, vector<32x1xf32>
      %c0_36 = arith.constant 0 : index
      %c0_37 = arith.constant 0 : index
      %47 = vector.load %arg13[%c0_36, %c0_37] : memref<2x32xf32, #tpu.memory_space<vmem>>, vector<2x32xf32>
      %c0_38 = arith.constant 0 : index
      %c0_39 = arith.constant 0 : index
      %48 = vector.load %arg14[%c0_38, %c0_39] : memref<2x1xf32, #tpu.memory_space<vmem>>, vector<2x1xf32>
      %cst_40 = arith.constant dense<0.000000e+00> : vector<2x1xf32>
      %49 = tpu.matmul %47, %46, %cst_40 {dimension_numbers = #tpu.dot_dimension_numbers<[1], [0], [0], [1], [0, 0, 1, 1], [], []>} : vector<2x32xf32>, vector<32x1xf32>, vector<2x1xf32> -> vector<2x1xf32>
      %50 = arith.addf %49, %48 : vector<2x1xf32>
      %c0_41 = arith.constant 0 : index
      %c0_42 = arith.constant 0 : index
      %c0_43 = arith.constant 0 : index
      %51 = vector.load %arg16[%c0_41, %c0_42, %c0_43] : memref<1x2x1xf32, #tpu.memory_space<vmem>>, vector<1x2x1xf32>
      %52 = vector.shape_cast %51 : vector<1x2x1xf32> to vector<2x1xf32>
      %53 = vector.shape_cast %50 : vector<2x1xf32> to vector<1x2x1xf32>
      tpu.vector_store %arg16[%c0_41, %c0_42, %c0_43], %53 {strides = array<i32>} : memref<1x2x1xf32, #tpu.memory_space<vmem>>, vector<1x2x1xf32>,
    } else {
    }
    return
  }
  func.func @transform_0(%arg0: i32, %arg1: i32) -> (i32, i32, i32) {
    %c0_i32 = arith.constant 0 : i32
    %c0_i32_0 = arith.constant 0 : i32
    %c0_i32_1 = arith.constant 0 : i32
    return %arg0, %c0_i32, %c0_i32_0 : i32, i32, i32
  }
  func.func @transform_1(%arg0: i32, %arg1: i32) -> (i32, i32, i32) {
    %c0_i32 = arith.constant 0 : i32
    %c0_i32_0 = arith.constant 0 : i32
    %c0_i32_1 = arith.constant 0 : i32
    return %arg0, %c0_i32, %c0_i32_0 : i32, i32, i32
  }
  func.func @transform_2(%arg0: i32, %arg1: i32) -> (i32, i32) {
    %c0_i32 = arith.constant 0 : i32
    %c0_i32_0 = arith.constant 0 : i32
    return %c0_i32, %arg1 : i32, i32
  }
  func.func @transform_3(%arg0: i32, %arg1: i32) -> (i32, i32) {
    %c0_i32 = arith.constant 0 : i32
    %c0_i32_0 = arith.constant 0 : i32
    %c0_i32_1 = arith.constant 0 : i32
    return %c0_i32, %c0_i32_0 : i32, i32
  }
  func.func @transform_4(%arg0: i32, %arg1: i32) -> (i32, i32) {
    %c0_i32 = arith.constant 0 : i32
    %c0_i32_0 = arith.constant 0 : i32
    %c0_i32_1 = arith.constant 0 : i32
    return %c0_i32, %c0_i32_0 : i32, i32
  }
  func.func @transform_5(%arg0: i32, %arg1: i32) -> (i32, i32) {
    %c0_i32 = arith.constant 0 : i32
    %c0_i32_0 = arith.constant 0 : i32
    %c0_i32_1 = arith.constant 0 : i32
    return %c0_i32, %c0_i32_0 : i32, i32
  }
  func.func @transform_6(%arg0: i32, %arg1: i32) -> (i32, i32) {
    %c0_i32 = arith.constant 0 : i32
    %c0_i32_0 = arith.constant 0 : i32
    %c0_i32_1 = arith.constant 0 : i32
    return %c0_i32, %c0_i32_0 : i32, i32
  }
  func.func @transform_7(%arg0: i32, %arg1: i32) -> (i32, i32) {
    %c0_i32 = arith.constant 0 : i32
    %c0_i32_0 = arith.constant 0 : i32
    %c0_i32_1 = arith.constant 0 : i32
    return %c0_i32, %c0_i32_0 : i32, i32
  }
  func.func @transform_8(%arg0: i32, %arg1: i32) -> (i32, i32) {
    %c0_i32 = arith.constant 0 : i32
    %c0_i32_0 = arith.constant 0 : i32
    %c0_i32_1 = arith.constant 0 : i32
    return %c0_i32, %c0_i32_0 : i32, i32
  }
  func.func @transform_9(%arg0: i32, %arg1: i32) -> (i32, i32) {
    %c0_i32 = arith.constant 0 : i32
    %c0_i32_0 = arith.constant 0 : i32
    %c0_i32_1 = arith.constant 0 : i32
    return %c0_i32, %c0_i32_0 : i32, i32
  }
  func.func @transform_10(%arg0: i32, %arg1: i32) -> (i32, i32) {
    %c0_i32 = arith.constant 0 : i32
    %c0_i32_0 = arith.constant 0 : i32
    %c0_i32_1 = arith.constant 0 : i32
    return %c0_i32, %c0_i32_0 : i32, i32
  }
  func.func @transform_11(%arg0: i32, %arg1: i32) -> (i32, i32) {
    %c0_i32 = arith.constant 0 : i32
    %c0_i32_0 = arith.constant 0 : i32
    %c0_i32_1 = arith.constant 0 : i32
    return %c0_i32, %c0_i32_0 : i32, i32
  }
  func.func @transform_12(%arg0: i32, %arg1: i32) -> (i32, i32) {
    %c0_i32 = arith.constant 0 : i32
    %c0_i32_0 = arith.constant 0 : i32
    %c0_i32_1 = arith.constant 0 : i32
    return %c0_i32, %c0_i32_0 : i32, i32
  }
  func.func @transform_13(%arg0: i32, %arg1: i32) -> (i32, i32, i32) {
    %c0_i32 = arith.constant 0 : i32
    %c0_i32_0 = arith.constant 0 : i32
    return %arg0, %c0_i32, %arg1 : i32, i32, i32
  }
  func.func @transform_14(%arg0: i32, %arg1: i32) -> (i32, i32, i32) {
    %c0_i32 = arith.constant 0 : i32
    %c0_i32_0 = arith.constant 0 : i32
    %c0_i32_1 = arith.constant 0 : i32
    return %arg0, %c0_i32, %c0_i32_0 : i32, i32, i32
  }
}

</mosaic_0001>

<llo_original>
// kernel: flame_generator_forward.1
$region0: #{flame_generator_forward.1}
  #allocation0 [shape = 'u32[]', space=smem, size = 0x4, offset = 0x4, fixed_abs, tag = 'smem constant byte address 0x4 - core index']
  #allocation1 [shape = 'u32[72,128]{1,0:T(1,128)}', space=vmem, size = 0x9000, scoped, tag = 'internal scratch']
  %s0 = inlined_call_operand.vmem [shape: f32[2,6,1], index: 0, kind: input, shape index: {}]
  %s1 = inlined_call_operand.vmem [shape: f32[2,4,1], index: 1, kind: input, shape index: {}]
  %s2 = inlined_call_operand.vmem [shape: f32[6,256], index: 2, kind: input, shape index: {}]
  %s3 = inlined_call_operand.hbm [shape: f32[32,6], index: 3, kind: input, shape index: {}]
  %s4 = inlined_call_operand.hbm [shape: f32[32,1], index: 4, kind: input, shape index: {}]
  %s5 = inlined_call_operand.vmem [shape: f32[32,32], index: 5, kind: input, shape index: {}]
  %s6 = inlined_call_operand.vmem [shape: f32[32,1], index: 6, kind: input, shape index: {}]
  %s7 = inlined_call_operand.vmem [shape: f32[4,32], index: 7, kind: input, shape index: {}]
  %s8 = inlined_call_operand.vmem [shape: f32[4,1], index: 8, kind: input, shape index: {}]
  %s9 = inlined_call_operand.vmem [shape: f32[32,4], index: 9, kind: input, shape index: {}]
  %s10 = inlined_call_operand.vmem [shape: f32[32,1], index: 10, kind: input, shape index: {}]
  %s11 = inlined_call_operand.vmem [shape: f32[2,32], index: 11, kind: input, shape index: {}]
  %s12 = inlined_call_operand.vmem [shape: f32[2,1], index: 12, kind: input, shape index: {}]
  %s13 = inlined_call_operand.vmem [shape: f32[2,4,256], index: 13, kind: output, shape index: {0}]
  %s14 = inlined_call_operand.vmem [shape: f32[2,2,1], index: 14, kind: output, shape index: {1}]
  %15 = xla_tuple %s13, %s14
  %s16 = sld [smem:[#allocation0]]
  $region105: #{flame_generator_forward.1} parent=0
    _
  %s18 = ssub.s32 1, %s16
  %s19 = scalar_select 0, %s18, %s16
  $region1: #{flame_generator_forward.1} parent=0
    #allocation2 [shape = 'u8[16384]{0}', space=vmem, size = 0x4000, scoped, tag = 'input window, operand 3, single buffered']
    #allocation3 [shape = 's32[2]{0}', space=sflag, size = 0x8, scoped, tag = 'scoped memory for flame_generator_forward.1']
    #allocation4 [shape = 'u8[16384]{0}', space=vmem, size = 0x4000, scoped, tag = 'input window, operand 4, single buffered']
    #allocation5 [shape = 's32[1]{0}', space=sflag, size = 0x4, scoped, tag = 'scoped memory for flame_generator_forward.1']
    %20 = vsyncpa [#allocation3], 0
    %21 = vsyncpa [#allocation5], 0
    loop: start=0, step=1, limit=4
    $region2: #{flame_generator_forward.1} parent=1 // loop_pre_header
      _
    $region3: #{flame_generator_forward.1} parent=1 // loop_header
      %s23 = sphi 0, %s27
      %p24 = scmp.ge.s32.totalorder %s23, 4
      %s30 = sphi 0, %s42
      %s31 = sphi 0, %s38
      %s32 = sphi 0, %s30
      %s33 = sphi 0, %s31
      %s34 = sphi 0, %s32
      %s35 = sphi 0, %s33
      %s45 = sphi 0, %s47
      %s48 = sphi 0, %s45
      %s49 = sphi 0, %s48
      %s65 = sphi 0, %s49
      %s71 = sphi 0, %s73
      %s74 = sphi 0, %s71
      %s75 = sphi 0, %s74
      %s91 = sphi 0, %s75
      %s97 = sphi 0, %s99
      %s100 = sphi 0, %s97
      %s101 = sphi 0, %s100
      %s117 = sphi 0, %s101
      %s121 = sphi 0, %s121
      %s123 = sphi 0, %s121
      %s124 = sphi 0, %s123
      %s138 = sphi 0, %s124
      %s142 = sphi 0, %s142
      %s144 = sphi 0, %s142
      %s145 = sphi 0, %s144
      %s159 = sphi 0, %s145
      %s163 = sphi 0, %s163
      %s165 = sphi 0, %s163
      %s166 = sphi 0, %s165
      %s180 = sphi 0, %s166
      %s184 = sphi 0, %s184
      %s186 = sphi 0, %s184
      %s187 = sphi 0, %s186
      %s201 = sphi 0, %s187
      %s205 = sphi 0, %s205
      %s207 = sphi 0, %s205
      %s208 = sphi 0, %s207
      %s222 = sphi 0, %s208
      %s226 = sphi 0, %s226
      %s228 = sphi 0, %s226
      %s229 = sphi 0, %s228
      %s243 = sphi 0, %s229
      %s247 = sphi 0, %s247
      %s249 = sphi 0, %s247
      %s250 = sphi 0, %s249
      %s264 = sphi 0, %s250
      %s268 = sphi 0, %s268
      %s270 = sphi 0, %s268
      %s271 = sphi 0, %s270
      %s285 = sphi 0, %s271
      %s289 = sphi 0, %s289
      %s291 = sphi 0, %s289
      %s292 = sphi 0, %s291
      %s306 = sphi 0, %s292
      %s310 = sphi 0, %s310
      %s312 = sphi 0, %s310
      %s313 = sphi 0, %s312
      %s327 = sphi 0, %s313
      %s335 = sphi 0, %s337
      %s338 = sphi 0, %s335
      %s339 = sphi 0, %s338
      %s355 = sphi 0, %s339
      %s361 = sphi 0, %s363
      %s364 = sphi 0, %s361
      %s365 = sphi 0, %s364
      %s381 = sphi 0, %s365
    $region4: #{flame_generator_forward.1} parent=1 // loop_header_branch
      %26 = sbr.rel (%p24) target = $region8
    $region5: #{flame_generator_forward.1} parent=1 // loop_body
      %s28 = ssub.s32 %s23, 1
      %s29 = ssub.s32 %s23, 2
      %s36 = sadd.s32 1, %s31
      %p37 = scmp.ge.s32.totalorder %s36, 1
      %s38 = scalar_select %p37, 0, %s36
      %s39 = sadd.s32 1, %s30
      %s40 = scalar_select %p37, %s39, %s30
      %p41 = scmp.ge.s32.totalorder %s40, 2
      %s42 = scalar_select %p41, 0, %s40
      %s43 = ssub.s32 %s30, %s42
      %p44 = scmp.eq.s32.totalorder %s43, 0
      %s46 = sadd.s32 %s45, 1
      %s47 = scalar_select %p44, %s45, %s46
      %p50 = pneg %p44
      %p51 = scmp.eq.s32.totalorder %s23, 1
      %p52 = por %p50, %p51
      %p53 = scmp.ne.s32.totalorder %s45, %s48
      %p54 = scmp.eq.s32.totalorder %s23, 0
      %p55 = por %p53, %p54
      %p56 = scmp.ne.s32.totalorder %s45, %s48
      %p57 = scmp.eq.s32.totalorder %s28, 1
      %p58 = por %p56, %p57
      %p59 = scmp.ne.s32.totalorder %s48, %s49
      %p60 = scmp.eq.s32.totalorder %s28, 0
      %p61 = por %p59, %p60
      %p62 = scmp.ne.s32.totalorder %s48, %s49
      %p63 = scmp.eq.s32.totalorder %s29, 1
      %p64 = por %p62, %p63
      %p66 = scmp.ne.s32.totalorder %s49, %s65
      %p67 = scmp.eq.s32.totalorder %s29, 0
      %p68 = por %p66, %p67
      %s69 = ssub.s32 %s30, %s42
      %p70 = scmp.eq.s32.totalorder %s69, 0
      %s72 = sadd.s32 %s71, 1
      %s73 = scalar_select %p70, %s71, %s72
      %p76 = pneg %p70
      %p77 = scmp.eq.s32.totalorder %s23, 1
      %p78 = por %p76, %p77
      %p79 = scmp.ne.s32.totalorder %s71, %s74
      %p80 = scmp.eq.s32.totalorder %s23, 0
      %p81 = por %p79, %p80
      %p82 = scmp.ne.s32.totalorder %s71, %s74
      %p83 = scmp.eq.s32.totalorder %s28, 1
      %p84 = por %p82, %p83
      %p85 = scmp.ne.s32.totalorder %s74, %s75
      %p86 = scmp.eq.s32.totalorder %s28, 0
      %p87 = por %p85, %p86
      %p88 = scmp.ne.s32.totalorder %s74, %s75
      %p89 = scmp.eq.s32.totalorder %s29, 1
      %p90 = por %p88, %p89
      %p92 = scmp.ne.s32.totalorder %s75, %s91
      %p93 = scmp.eq.s32.totalorder %s29, 0
      %p94 = por %p92, %p93
      %s95 = ssub.s32 %s31, %s38
      %p96 = scmp.eq.s32.totalorder %s95, 0
      %s98 = sadd.s32 %s97, 1
      %s99 = scalar_select %p96, %s97, %s98
      %p102 = pneg %p96
      %p103 = scmp.eq.s32.totalorder %s23, 1
      %p104 = por %p102, %p103
      %p105 = scmp.ne.s32.totalorder %s97, %s100
      %p106 = scmp.eq.s32.totalorder %s23, 0
      %p107 = por %p105, %p106
      %p108 = scmp.ne.s32.totalorder %s97, %s100
      %p109 = scmp.eq.s32.totalorder %s28, 1
      %p110 = por %p108, %p109
      %p111 = scmp.ne.s32.totalorder %s100, %s101
      %p112 = scmp.eq.s32.totalorder %s28, 0
      %p113 = por %p111, %p112
      %p114 = scmp.ne.s32.totalorder %s100, %s101
      %p115 = scmp.eq.s32.totalorder %s29, 1
      %p116 = por %p114, %p115
      %p118 = scmp.ne.s32.totalorder %s101, %s117
      %p119 = scmp.eq.s32.totalorder %s29, 0
      %p120 = por %p118, %p119
      %s122 = sadd.s32 %s121, 1
      %p125 = scmp.eq.s32.totalorder %s23, 1
      %p126 = scmp.ne.s32.totalorder %s121, %s123
      %p127 = scmp.eq.s32.totalorder %s23, 0
      %p128 = por %p126, %p127
      %p129 = scmp.ne.s32.totalorder %s121, %s123
      %p130 = scmp.eq.s32.totalorder %s28, 1
      %p131 = por %p129, %p130
      %p132 = scmp.ne.s32.totalorder %s123, %s124
      %p133 = scmp.eq.s32.totalorder %s28, 0
      %p134 = por %p132, %p133
      %p135 = scmp.ne.s32.totalorder %s123, %s124
      %p136 = scmp.eq.s32.totalorder %s29, 1
      %p137 = por %p135, %p136
      %p139 = scmp.ne.s32.totalorder %s124, %s138
      %p140 = scmp.eq.s32.totalorder %s29, 0
      %p141 = por %p139, %p140
      %s143 = sadd.s32 %s142, 1
      %p146 = scmp.eq.s32.totalorder %s23, 1
      %p147 = scmp.ne.s32.totalorder %s142, %s144
      %p148 = scmp.eq.s32.totalorder %s23, 0
      %p149 = por %p147, %p148
      %p150 = scmp.ne.s32.totalorder %s142, %s144
      %p151 = scmp.eq.s32.totalorder %s28, 1
      %p152 = por %p150, %p151
      %p153 = scmp.ne.s32.totalorder %s144, %s145
      %p154 = scmp.eq.s32.totalorder %s28, 0
      %p155 = por %p153, %p154
      %p156 = scmp.ne.s32.totalorder %s144, %s145
      %p157 = scmp.eq.s32.totalorder %s29, 1
      %p158 = por %p156, %p157
      %p160 = scmp.ne.s32.totalorder %s145, %s159
      %p161 = scmp.eq.s32.totalorder %s29, 0
      %p162 = por %p160, %p161
      %s164 = sadd.s32 %s163, 1
      %p167 = scmp.eq.s32.totalorder %s23, 1
      %p168 = scmp.ne.s32.totalorder %s163, %s165
      %p169 = scmp.eq.s32.totalorder %s23, 0
      %p170 = por %p168, %p169
      %p171 = scmp.ne.s32.totalorder %s163, %s165
      %p172 = scmp.eq.s32.totalorder %s28, 1
      %p173 = por %p171, %p172
      %p174 = scmp.ne.s32.totalorder %s165, %s166
      %p175 = scmp.eq.s32.totalorder %s28, 0
      %p176 = por %p174, %p175
      %p177 = scmp.ne.s32.totalorder %s165, %s166
      %p178 = scmp.eq.s32.totalorder %s29, 1
      %p179 = por %p177, %p178
      %p181 = scmp.ne.s32.totalorder %s166, %s180
      %p182 = scmp.eq.s32.totalorder %s29, 0
      %p183 = por %p181, %p182
      %s185 = sadd.s32 %s184, 1
      %p188 = scmp.eq.s32.totalorder %s23, 1
      %p189 = scmp.ne.s32.totalorder %s184, %s186
      %p190 = scmp.eq.s32.totalorder %s23, 0
      %p191 = por %p189, %p190
      %p192 = scmp.ne.s32.totalorder %s184, %s186
      %p193 = scmp.eq.s32.totalorder %s28, 1
      %p194 = por %p192, %p193
      %p195 = scmp.ne.s32.totalorder %s186, %s187
      %p196 = scmp.eq.s32.totalorder %s28, 0
      %p197 = por %p195, %p196
      %p198 = scmp.ne.s32.totalorder %s186, %s187
      %p199 = scmp.eq.s32.totalorder %s29, 1
      %p200 = por %p198, %p199
      %p202 = scmp.ne.s32.totalorder %s187, %s201
      %p203 = scmp.eq.s32.totalorder %s29, 0
      %p204 = por %p202, %p203
      %s206 = sadd.s32 %s205, 1
      %p209 = scmp.eq.s32.totalorder %s23, 1
      %p210 = scmp.ne.s32.totalorder %s205, %s207
      %p211 = scmp.eq.s32.totalorder %s23, 0
      %p212 = por %p210, %p211
      %p213 = scmp.ne.s32.totalorder %s205, %s207
      %p214 = scmp.eq.s32.totalorder %s28, 1
      %p215 = por %p213, %p214
      %p216 = scmp.ne.s32.totalorder %s207, %s208
      %p217 = scmp.eq.s32.totalorder %s28, 0
      %p218 = por %p216, %p217
      %p219 = scmp.ne.s32.totalorder %s207, %s208
      %p220 = scmp.eq.s32.totalorder %s29, 1
      %p221 = por %p219, %p220
      %p223 = scmp.ne.s32.totalorder %s208, %s222
      %p224 = scmp.eq.s32.totalorder %s29, 0
      %p225 = por %p223, %p224
      %s227 = sadd.s32 %s226, 1
      %p230 = scmp.eq.s32.totalorder %s23, 1
      %p231 = scmp.ne.s32.totalorder %s226, %s228
      %p232 = scmp.eq.s32.totalorder %s23, 0
      %p233 = por %p231, %p232
      %p234 = scmp.ne.s32.totalorder %s226, %s228
      %p235 = scmp.eq.s32.totalorder %s28, 1
      %p236 = por %p234, %p235
      %p237 = scmp.ne.s32.totalorder %s228, %s229
      %p238 = scmp.eq.s32.totalorder %s28, 0
      %p239 = por %p237, %p238
      %p240 = scmp.ne.s32.totalorder %s228, %s229
      %p241 = scmp.eq.s32.totalorder %s29, 1
      %p242 = por %p240, %p241
      %p244 = scmp.ne.s32.totalorder %s229, %s243
      %p245 = scmp.eq.s32.totalorder %s29, 0
      %p246 = por %p244, %p245
      %s248 = sadd.s32 %s247, 1
      %p251 = scmp.eq.s32.totalorder %s23, 1
      %p252 = scmp.ne.s32.totalorder %s247, %s249
      %p253 = scmp.eq.s32.totalorder %s23, 0
      %p254 = por %p252, %p253
      %p255 = scmp.ne.s32.totalorder %s247, %s249
      %p256 = scmp.eq.s32.totalorder %s28, 1
      %p257 = por %p255, %p256
      %p258 = scmp.ne.s32.totalorder %s249, %s250
      %p259 = scmp.eq.s32.totalorder %s28, 0
      %p260 = por %p258, %p259
      %p261 = scmp.ne.s32.totalorder %s249, %s250
      %p262 = scmp.eq.s32.totalorder %s29, 1
      %p263 = por %p261, %p262
      %p265 = scmp.ne.s32.totalorder %s250, %s264
      %p266 = scmp.eq.s32.totalorder %s29, 0
      %p267 = por %p265, %p266
      %s269 = sadd.s32 %s268, 1
      %p272 = scmp.eq.s32.totalorder %s23, 1
      %p273 = scmp.ne.s32.totalorder %s268, %s270
      %p274 = scmp.eq.s32.totalorder %s23, 0
      %p275 = por %p273, %p274
      %p276 = scmp.ne.s32.totalorder %s268, %s270
      %p277 = scmp.eq.s32.totalorder %s28, 1
      %p278 = por %p276, %p277
      %p279 = scmp.ne.s32.totalorder %s270, %s271
      %p280 = scmp.eq.s32.totalorder %s28, 0
      %p281 = por %p279, %p280
      %p282 = scmp.ne.s32.totalorder %s270, %s271
      %p283 = scmp.eq.s32.totalorder %s29, 1
      %p284 = por %p282, %p283
      %p286 = scmp.ne.s32.totalorder %s271, %s285
      %p287 = scmp.eq.s32.totalorder %s29, 0
      %p288 = por %p286, %p287
      %s290 = sadd.s32 %s289, 1
      %p293 = scmp.eq.s32.totalorder %s23, 1
      %p294 = scmp.ne.s32.totalorder %s289, %s291
      %p295 = scmp.eq.s32.totalorder %s23, 0
      %p296 = por %p294, %p295
      %p297 = scmp.ne.s32.totalorder %s289, %s291
      %p298 = scmp.eq.s32.totalorder %s28, 1
      %p299 = por %p297, %p298
      %p300 = scmp.ne.s32.totalorder %s291, %s292
      %p301 = scmp.eq.s32.totalorder %s28, 0
      %p302 = por %p300, %p301
      %p303 = scmp.ne.s32.totalorder %s291, %s292
      %p304 = scmp.eq.s32.totalorder %s29, 1
      %p305 = por %p303, %p304
      %p307 = scmp.ne.s32.totalorder %s292, %s306
      %p308 = scmp.eq.s32.totalorder %s29, 0
      %p309 = por %p307, %p308
      %s311 = sadd.s32 %s310, 1
      %p314 = scmp.eq.s32.totalorder %s23, 1
      %p315 = scmp.ne.s32.totalorder %s310, %s312
      %p316 = scmp.eq.s32.totalorder %s23, 0
      %p317 = por %p315, %p316
      %p318 = scmp.ne.s32.totalorder %s310, %s312
      %p319 = scmp.eq.s32.totalorder %s28, 1
      %p320 = por %p318, %p319
      %p321 = scmp.ne.s32.totalorder %s312, %s313
      %p322 = scmp.eq.s32.totalorder %s28, 0
      %p323 = por %p321, %p322
      %p324 = scmp.ne.s32.totalorder %s312, %s313
      %p325 = scmp.eq.s32.totalorder %s29, 1
      %p326 = por %p324, %p325
      %p328 = scmp.ne.s32.totalorder %s313, %s327
      %p329 = scmp.eq.s32.totalorder %s29, 0
      %p330 = por %p328, %p329
      %s331 = ssub.s32 %s30, %s42
      %s332 = ssub.s32 %s31, %s38
      %s333 = sor.u32 %s331, %s332
      %p334 = scmp.eq.s32.totalorder %s333, 0
      %s336 = sadd.s32 %s335, 1
      %s337 = scalar_select %p334, %s335, %s336
      %p340 = pneg %p334
      %p341 = scmp.eq.s32.totalorder %s23, 1
      %p342 = por %p340, %p341
      %p343 = scmp.ne.s32.totalorder %s335, %s338
      %p344 = scmp.eq.s32.totalorder %s23, 0
      %p345 = por %p343, %p344
      %p346 = scmp.ne.s32.totalorder %s335, %s338
      %p347 = scmp.eq.s32.totalorder %s28, 1
      %p348 = por %p346, %p347
      %p349 = scmp.ne.s32.totalorder %s338, %s339
      %p350 = scmp.eq.s32.totalorder %s28, 0
      %p351 = por %p349, %p350
      %p352 = scmp.ne.s32.totalorder %s338, %s339
      %p353 = scmp.eq.s32.totalorder %s29, 1
      %p354 = por %p352, %p353
      %p356 = scmp.ne.s32.totalorder %s339, %s355
      %p357 = scmp.eq.s32.totalorder %s29, 0
      %p358 = por %p356, %p357
      %s359 = ssub.s32 %s30, %s42
      %p360 = scmp.eq.s32.totalorder %s359, 0
      %s362 = sadd.s32 %s361, 1
      %s363 = scalar_select %p360, %s361, %s362
      %p366 = pneg %p360
      %p367 = scmp.eq.s32.totalorder %s23, 1
      %p368 = por %p366, %p367
      %p369 = scmp.ne.s32.totalorder %s361, %s364
      %p370 = scmp.eq.s32.totalorder %s23, 0
      %p371 = por %p369, %p370
      %p372 = scmp.ne.s32.totalorder %s361, %s364
      %p373 = scmp.eq.s32.totalorder %s28, 1
      %p374 = por %p372, %p373
      %p375 = scmp.ne.s32.totalorder %s364, %s365
      %p376 = scmp.eq.s32.totalorder %s28, 0
      %p377 = por %p375, %p376
      %p378 = scmp.ne.s32.totalorder %s364, %s365
      %p379 = scmp.eq.s32.totalorder %s29, 1
      %p380 = por %p378, %p379
      %p382 = scmp.ne.s32.totalorder %s365, %s381
      %p383 = scmp.eq.s32.totalorder %s29, 0
      %p384 = por %p382, %p383
      %p385 = scmp.le.s32.totalorder 1, %s23
      %p386 = scmp.lt.s32.totalorder %s23, 3
      %p387 = pnand %p385, %p386
      %p388 = pneg %p387
      // Predicated region
      $region9: #{flame_generator_forward.1} parent=5 // pred_check
        _
      $region10: #{flame_generator_forward.1} parent=5 // pred_check_branch
        %390 = sbr.rel (%p387) target = $region12
      $region11: #{flame_generator_forward.1} parent=5 // pred_region
        %s391 = ssub.s32 %s23, 1
        // Predicated region
        $region13: #{flame_generator_forward.1} parent=11 // pred_check
          %p392 = pneg %p113
        $region14: #{flame_generator_forward.1} parent=11 // pred_check_branch
          %394 = sbr.rel (%p392) target = $region16
        $region15: #{flame_generator_forward.1} parent=11 // pred_region
          %s395 = smul.u32 2, %s33
          %p396 = scmp.lt.s32.totalorder %s395, 1
          %s397 = scalar_select %p396, %s395, 1
          %s398 = smul.addr %s397, 8
          %s399 = scalar_lea.vmem %s2, %s398
          %s400 = smul.u32 2, %s33
        $region16: #{flame_generator_forward.1} parent=11 // pred_fallthru
          _
        // Predicated region
        $region17: #{flame_generator_forward.1} parent=11 // pred_check
          %p401 = pneg %p134
        $region18: #{flame_generator_forward.1} parent=11 // pred_check_branch
          %403 = sbr.rel (%p401) target = $region20
        $region19: #{flame_generator_forward.1} parent=11 // pred_region
          %405 = vsyncadd [#allocation3], 0
          %s406 = sshll.u32 %s3, 4
          %s407 = int_to_ptr.hbm [resolvable:$true] %s406
          %s408 = sshll.u32 [#allocation2], 4
          %s409 = int_to_ptr.vmem [resolvable:$true] %s408
          %414 = dma.hbm_to_vmem [thread:$0]  %s407, 512, %s409, [#allocation3], 128, 128, 8
        $region20: #{flame_generator_forward.1} parent=11 // pred_fallthru
          _
        // Predicated region
        $region21: #{flame_generator_forward.1} parent=11 // pred_check
          %p415 = pneg %p155
        $region22: #{flame_generator_forward.1} parent=11 // pred_check_branch
          %417 = sbr.rel (%p415) target = $region24
        $region23: #{flame_generator_forward.1} parent=11 // pred_region
          %419 = vsyncadd [#allocation5], 0
          %s420 = sshll.u32 %s4, 4
          %s421 = int_to_ptr.hbm [resolvable:$true] %s420
          %s422 = sshll.u32 [#allocation4], 4
          %s423 = int_to_ptr.vmem [resolvable:$true] %s422
          %428 = dma.hbm_to_vmem [thread:$0]  %s421, 512, %s423, [#allocation5], 128, 128, 8
        $region24: #{flame_generator_forward.1} parent=11 // pred_fallthru
          _
        // Predicated region
        $region25: #{flame_generator_forward.1} parent=11 // pred_check
          %p429 = pneg %p176
        $region26: #{flame_generator_forward.1} parent=11 // pred_check_branch
          %431 = sbr.rel (%p429) target = $region28
        $region27: #{flame_generator_forward.1} parent=11 // pred_region
          _
        $region28: #{flame_generator_forward.1} parent=11 // pred_fallthru
          _
        // Predicated region
        $region29: #{flame_generator_forward.1} parent=11 // pred_check
          %p432 = pneg %p197
        $region30: #{flame_generator_forward.1} parent=11 // pred_check_branch
          %434 = sbr.rel (%p432) target = $region32
        $region31: #{flame_generator_forward.1} parent=11 // pred_region
          _
        $region32: #{flame_generator_forward.1} parent=11 // pred_fallthru
          _
        // Predicated region
        $region33: #{flame_generator_forward.1} parent=11 // pred_check
          %p435 = pneg %p218
        $region34: #{flame_generator_forward.1} parent=11 // pred_check_branch
          %437 = sbr.rel (%p435) target = $region36
        $region35: #{flame_generator_forward.1} parent=11 // pred_region
          _
        $region36: #{flame_generator_forward.1} parent=11 // pred_fallthru
          _
        // Predicated region
        $region37: #{flame_generator_forward.1} parent=11 // pred_check
          %p438 = pneg %p239
        $region38: #{flame_generator_forward.1} parent=11 // pred_check_branch
          %440 = sbr.rel (%p438) target = $region40
        $region39: #{flame_generator_forward.1} parent=11 // pred_region
          _
        $region40: #{flame_generator_forward.1} parent=11 // pred_fallthru
          _
        // Predicated region
        $region41: #{flame_generator_forward.1} parent=11 // pred_check
          %p441 = pneg %p260
        $region42: #{flame_generator_forward.1} parent=11 // pred_check_branch
          %443 = sbr.rel (%p441) target = $region44
        $region43: #{flame_generator_forward.1} parent=11 // pred_region
          _
        $region44: #{flame_generator_forward.1} parent=11 // pred_fallthru
          _
        // Predicated region
        $region45: #{flame_generator_forward.1} parent=11 // pred_check
          %p444 = pneg %p281
        $region46: #{flame_generator_forward.1} parent=11 // pred_check_branch
          %446 = sbr.rel (%p444) target = $region48
        $region47: #{flame_generator_forward.1} parent=11 // pred_region
          _
        $region48: #{flame_generator_forward.1} parent=11 // pred_fallthru
          _
        // Predicated region
        $region49: #{flame_generator_forward.1} parent=11 // pred_check
          %p447 = pneg %p302
        $region50: #{flame_generator_forward.1} parent=11 // pred_check_branch
          %449 = sbr.rel (%p447) target = $region52
        $region51: #{flame_generator_forward.1} parent=11 // pred_region
          _
        $region52: #{flame_generator_forward.1} parent=11 // pred_fallthru
          _
        // Predicated region
        $region53: #{flame_generator_forward.1} parent=11 // pred_check
          %p450 = pneg %p323
        $region54: #{flame_generator_forward.1} parent=11 // pred_check_branch
          %452 = sbr.rel (%p450) target = $region56
        $region55: #{flame_generator_forward.1} parent=11 // pred_region
          _
        $region56: #{flame_generator_forward.1} parent=11 // pred_fallthru
          _
      $region12: #{flame_generator_forward.1} parent=5 // pred_fallthru
        _
      %p453 = scmp.lt.s32.totalorder %s23, 2
      // Predicated region
      $region57: #{flame_generator_forward.1} parent=5 // pred_check
        %p454 = pneg %p453
      $region58: #{flame_generator_forward.1} parent=5 // pred_check_branch
        %456 = sbr.rel (%p454) target = $region60
      $region59: #{flame_generator_forward.1} parent=5 // pred_region
        // Predicated region
        $region61: #{flame_generator_forward.1} parent=59 // pred_check
          %p457 = pneg %p55
        $region62: #{flame_generator_forward.1} parent=59 // pred_check_branch
          %459 = sbr.rel (%p457) target = $region64
        $region63: #{flame_generator_forward.1} parent=59 // pred_region
          %p460 = scmp.lt.s32.totalorder %s30, 1
          %s461 = scalar_select %p460, %s30, 1
          %s462 = smul.addr %s461, 8
          %s463 = scalar_lea.vmem %s0, %s462
        $region64: #{flame_generator_forward.1} parent=59 // pred_fallthru
          _
        // Predicated region
        $region65: #{flame_generator_forward.1} parent=59 // pred_check
          %p464 = pneg %p81
        $region66: #{flame_generator_forward.1} parent=59 // pred_check_branch
          %466 = sbr.rel (%p464) target = $region68
        $region67: #{flame_generator_forward.1} parent=59 // pred_region
          %p467 = scmp.lt.s32.totalorder %s30, 1
          %s468 = scalar_select %p467, %s30, 1
          %s469 = smul.addr %s468, 4
          %s470 = scalar_lea.vmem %s1, %s469
        $region68: #{flame_generator_forward.1} parent=59 // pred_fallthru
          _
      $region60: #{flame_generator_forward.1} parent=5 // pred_fallthru
        _
      %p471 = scmp.le.s32.totalorder 1, %s23
      %p472 = scmp.lt.s32.totalorder %s23, 3
      %p473 = pnand %p471, %p472
      %p474 = pneg %p473
      // Predicated region
      $region69: #{flame_generator_forward.1} parent=5 // pred_check
        _
      $region70: #{flame_generator_forward.1} parent=5 // pred_check_branch
        %476 = sbr.rel (%p473) target = $region72
      $region71: #{flame_generator_forward.1} parent=5 // pred_region
        %s477 = ssub.s32 %s23, 1
        // Predicated region
        $region73: #{flame_generator_forward.1} parent=71 // pred_check
          %p478 = pneg %p134
        $region74: #{flame_generator_forward.1} parent=71 // pred_check_branch
          %480 = sbr.rel (%p478) target = $region76
        $region75: #{flame_generator_forward.1} parent=71 // pred_region
          %482 = dma.done [#allocation3], 512
        $region76: #{flame_generator_forward.1} parent=71 // pred_fallthru
          _
        // Predicated region
        $region77: #{flame_generator_forward.1} parent=71 // pred_check
          %p483 = pneg %p155
        $region78: #{flame_generator_forward.1} parent=71 // pred_check_branch
          %485 = sbr.rel (%p483) target = $region80
        $region79: #{flame_generator_forward.1} parent=71 // pred_region
          %487 = dma.done [#allocation5], 512
        $region80: #{flame_generator_forward.1} parent=71 // pred_fallthru
          _
        %p488 = scmp.lt.s32.totalorder %s32, 1
        %s489 = scalar_select %p488, %s32, 1
        %s490 = smul.addr %s489, 8
        %s491 = scalar_lea.vmem %s0, %s490
        %p492 = pneg %p61
        %p493 = pneg %p58
        %p494 = scmp.lt.s32.totalorder %s32, 1
        %s495 = scalar_select %p494, %s32, 1
        %s496 = smul.addr %s495, 4
        %s497 = scalar_lea.vmem %s1, %s496
        %p498 = pneg %p87
        %p499 = pneg %p84
        %s500 = smul.u32 2, %s33
        %p501 = scmp.lt.s32.totalorder %s500, 1
        %s502 = scalar_select %p501, %s500, 1
        %s503 = smul.addr %s502, 8
        %s504 = scalar_lea.vmem %s2, %s503
        %p505 = pneg %p113
        %p506 = pneg %p110
        %p507 = pneg %p134
        %p508 = pneg %p131
        %p509 = pneg %p155
        %p510 = pneg %p152
        %p511 = pneg %p176
        %p512 = pneg %p173
        %p513 = pneg %p197
        %p514 = pneg %p194
        %p515 = pneg %p218
        %p516 = pneg %p215
        %p517 = pneg %p239
        %p518 = pneg %p236
        %p519 = pneg %p260
        %p520 = pneg %p257
        %p521 = pneg %p281
        %p522 = pneg %p278
        %p523 = pneg %p302
        %p524 = pneg %p299
        %p525 = pneg %p323
        %p526 = pneg %p320
        %p527 = pneg %p351
        %p528 = pneg %p348
        %s529 = smul.u32 2, %s33
        %p530 = scmp.lt.s32.totalorder %s32, 1
        %s531 = scalar_select %p530, %s32, 1
        %p532 = scmp.lt.s32.totalorder %s529, 1
        %s533 = scalar_select %p532, %s529, 1
        %s534 = smul.addr %s531, 2
        %s535 = sadd.s32 %s533, %s534
        %s536 = smul.addr %s535, 4
        %s537 = scalar_lea.vmem %s13, %s536
        %p538 = pneg %p377
        %p539 = pneg %p374
        %p540 = scmp.lt.s32.totalorder %s32, 1
        %s541 = scalar_select %p540, %s32, 1
        %s542 = smul.addr %s541, 2
        %s543 = scalar_lea.vmem %s14, %s542
        %p544 = scmp.lt.s32.totalorder %s32, 1
        %s545 = scalar_select %p544, %s32, 1
        %s546 = smul.addr %s545, 8
        %s547 = scalar_lea.vmem %s0, %s546
        %p548 = scmp.lt.s32.totalorder %s32, 1
        %s549 = scalar_select %p548, %s32, 1
        %s550 = smul.addr %s549, 4
        %s551 = scalar_lea.vmem %s1, %s550
        %s552 = smul.u32 2, %s33
        %p553 = scmp.lt.s32.totalorder %s552, 1
        %s554 = scalar_select %p553, %s552, 1
        %s555 = smul.addr %s554, 8
        %s556 = scalar_lea.vmem %s2, %s555
        %s557 = smul.u32 2, %s33
        %s558 = smul.u32 2, %s33
        %p559 = scmp.lt.s32.totalorder %s32, 1
        %s560 = scalar_select %p559, %s32, 1
        %p561 = scmp.lt.s32.totalorder %s558, 1
        %s562 = scalar_select %p561, %s558, 1
        %s563 = smul.addr %s560, 2
        %s564 = sadd.s32 %s562, %s563
        %s565 = smul.addr %s564, 4
        %s566 = scalar_lea.vmem %s13, %s565
        %s567 = smul.u32 2, %s33
        %p568 = scmp.lt.s32.totalorder %s32, 1
        %s569 = scalar_select %p568, %s32, 1
        %s570 = smul.addr %s569, 2
        %s571 = scalar_lea.vmem %s14, %s570
        %v572 = vld [vmem:[%s556] sm:$0x3f]
        %v573 = vld [vmem:[%s556 + $0x8] sm:$0x3f]
        %v574 = vld [vmem:[%s547] sm:$0x3f]
        %576 = vset.pattern.permute.xlu0 0
        %577 = vperm.xlu0 %576, %v574
        %v578 = vpop.permute.xlu0 %577
        %v580 = vmul.f32 %v572, %v578
        %v581 = vmul.f32 %v573, %v578
        %v582 = vld [vmem:[#allocation2] sm:$0xff]
        %v583 = vld [vmem:[#allocation2 + $0x8] sm:$0xff]
        %v584 = vld [vmem:[#allocation2 + $0x10] sm:$0xff]
        %v585 = vld [vmem:[#allocation2 + $0x18] sm:$0xff]
        %v586 = vld [vmem:[#allocation4] sm:$0xff]
        %v587 = vld [vmem:[#allocation4 + $0x8] sm:$0xff]
        %v588 = vld [vmem:[#allocation4 + $0x10] sm:$0xff]
        %v589 = vld [vmem:[#allocation4 + $0x18] sm:$0xff]
        %591 = vset.pattern.permute.xlu0 0
        %592 = vperm.xlu0 %591, %v586
        %v593 = vpop.permute.xlu0 %592
        %596 = vset.pattern.permute.xlu0 0
        %597 = vperm.xlu0 %596, %v587
        %v598 = vpop.permute.xlu0 %597
        %601 = vset.pattern.permute.xlu0 0
        %602 = vperm.xlu0 %601, %v588
        %v603 = vpop.permute.xlu0 %602
        %606 = vset.pattern.permute.xlu0 0
        %607 = vperm.xlu0 %606, %v589
        %v608 = vpop.permute.xlu0 %607
        %vm610 = vcmask 48128
        %v612 = vsel %vm610, %v582, 0
        %v615 = vsel %vm610, %v583, 0
        %v618 = vsel %vm610, %v584, 0
        %v621 = vsel %vm610, %v585, 0
        %vm623 = vcmask 1045504
        %v625 = vsel %vm623, %v580, 0
        %v628 = vsel %vm623, %v581, 0
        %630 = vmatpush.msra.mxu0 0.0
        %631 = vmatpush.msra.mxu0 0.0
        %632 = vmatpush.msra.mxu0 0.0
        %633 = vmatpush.msra.mxu0 0.0
        %634 = vmatpush.msra.mxu0 0.0
        %635 = vmatpush.msra.mxu0 0.0
        %636 = vmatpush.msra.mxu0 0.0
        %637 = vmatpush.msra.mxu0 0.0
        %638 = vmatpush.msra.mxu0 0.0
        %639 = vmatpush.msra.mxu0 0.0
        %640 = vmatpush.msra.mxu0 0.0
        %641 = vmatpush.msra.mxu0 0.0
        %642 = vmatpush.msra.mxu0 0.0
        %643 = vmatpush.msra.mxu0 0.0
        %644 = vmatpush.msra.mxu0 0.0
        %645 = vmatpush.msra.mxu0 %v625
        %646 = vmatmul.f32.gmra.mxu0 %v612
        %v647 = vpop.f32.mrf.mxu0
        %v648 = vadd.f32 %v593, %v647
        %649 = vmatmul.f32.gmra.mxu0 %v615
        %v650 = vpop.f32.mrf.mxu0
        %v651 = vadd.f32 %v598, %v650
        %652 = vmatmul.f32.gmra.mxu0 %v618
        %v653 = vpop.f32.mrf.mxu0
        %v654 = vadd.f32 %v603, %v653
        %655 = vmatmul.f32.gmra.mxu0 %v621
        %v656 = vpop.f32.mrf.mxu0
        %v657 = vadd.f32 %v608, %v656
        %658 = vdwg.mxu0
        %659 = vmatpush.msra.mxu0 0.0
        %660 = vmatpush.msra.mxu0 0.0
        %661 = vmatpush.msra.mxu0 0.0
        %662 = vmatpush.msra.mxu0 0.0
        %663 = vmatpush.msra.mxu0 0.0
        %664 = vmatpush.msra.mxu0 0.0
        %665 = vmatpush.msra.mxu0 0.0
        %666 = vmatpush.msra.mxu0 0.0
        %667 = vmatpush.msra.mxu0 0.0
        %668 = vmatpush.msra.mxu0 0.0
        %669 = vmatpush.msra.mxu0 0.0
        %670 = vmatpush.msra.mxu0 0.0
        %671 = vmatpush.msra.mxu0 0.0
        %672 = vmatpush.msra.mxu0 0.0
        %673 = vmatpush.msra.mxu0 0.0
        %674 = vmatpush.msra.mxu0 %v628
        %675 = vmatmul.f32.gmra.mxu0 %v612
        %v676 = vpop.f32.mrf.mxu0
        %v677 = vadd.f32 %v593, %v676
        %678 = vmatmul.f32.gmra.mxu0 %v615
        %v679 = vpop.f32.mrf.mxu0
        %v680 = vadd.f32 %v598, %v679
        %681 = vmatmul.f32.gmra.mxu0 %v618
        %v682 = vpop.f32.mrf.mxu0
        %v683 = vadd.f32 %v603, %v682
        %684 = vmatmul.f32.gmra.mxu0 %v621
        %v685 = vpop.f32.mrf.mxu0
        %v686 = vadd.f32 %v608, %v685
        %687 = vdwg.mxu0
        %vm688 = vcmp.gt.f32.partialorder %v648, 0.0
        %vm689 = vcmp.gt.f32.partialorder %v677, 0.0
        %vm690 = vcmp.gt.f32.partialorder %v651, 0.0
        %vm691 = vcmp.gt.f32.partialorder %v680, 0.0
        %vm692 = vcmp.gt.f32.partialorder %v654, 0.0
        %vm693 = vcmp.gt.f32.partialorder %v683, 0.0
        %vm694 = vcmp.gt.f32.partialorder %v657, 0.0
        %vm695 = vcmp.gt.f32.partialorder %v686, 0.0
        %v696 = vmul.f32 %v648, 0.01
        %v697 = vmul.f32 %v677, 0.01
        %v698 = vmul.f32 %v651, 0.01
        %v699 = vmul.f32 %v680, 0.01
        %v700 = vmul.f32 %v654, 0.01
        %v701 = vmul.f32 %v683, 0.01
        %v702 = vmul.f32 %v657, 0.01
        %v703 = vmul.f32 %v686, 0.01
        %v704 = vsel %vm688, %v648, %v696
        %v705 = vsel %vm689, %v677, %v697
        %v706 = vsel %vm690, %v651, %v698
        %v707 = vsel %vm691, %v680, %v699
        %v708 = vsel %vm692, %v654, %v700
        %v709 = vsel %vm693, %v683, %v701
        %v710 = vsel %vm694, %v657, %v702
        %v711 = vsel %vm695, %v686, %v703
        %v712 = vld [vmem:[%s5] sm:$0xff]
        %v713 = vld [vmem:[%s5 + $0x8] sm:$0xff]
        %v714 = vld [vmem:[%s5 + $0x10] sm:$0xff]
        %v715 = vld [vmem:[%s5 + $0x18] sm:$0xff]
        %v716 = vld [vmem:[%s6] sm:$0xff]
        %v717 = vld [vmem:[%s6 + $0x8] sm:$0xff]
        %v718 = vld [vmem:[%s6 + $0x10] sm:$0xff]
        %v719 = vld [vmem:[%s6 + $0x18] sm:$0xff]
        %721 = vset.pattern.permute.xlu0 0
        %722 = vperm.xlu0 %721, %v716
        %v723 = vpop.permute.xlu0 %722
        %726 = vset.pattern.permute.xlu0 0
        %727 = vperm.xlu0 %726, %v717
        %v728 = vpop.permute.xlu0 %727
        %731 = vset.pattern.permute.xlu0 0
        %732 = vperm.xlu0 %731, %v718
        %v733 = vpop.permute.xlu0 %732
        %736 = vset.pattern.permute.xlu0 0
        %737 = vperm.xlu0 %736, %v719
        %v738 = vpop.permute.xlu0 %737
        %vm740 = vcmask 261120
        %v742 = vsel %vm740, %v712, 0
        %v745 = vsel %vm740, %v713, 0
        %v748 = vsel %vm740, %v714, 0
        %v751 = vsel %vm740, %v715, 0
        %753 = vmatpush.msra.mxu0 0.0
        %754 = vmatpush.msra.mxu0 0.0
        %755 = vmatpush.msra.mxu0 0.0
        %756 = vmatpush.msra.mxu0 0.0
        %757 = vmatpush.msra.mxu0 0.0
        %758 = vmatpush.msra.mxu0 0.0
        %759 = vmatpush.msra.mxu0 0.0
        %760 = vmatpush.msra.mxu0 0.0
        %761 = vmatpush.msra.mxu0 0.0
        %762 = vmatpush.msra.mxu0 0.0
        %763 = vmatpush.msra.mxu0 0.0
        %764 = vmatpush.msra.mxu0 0.0
        %765 = vmatpush.msra.mxu0 %v710
        %766 = vmatpush.msra.mxu0 %v708
        %767 = vmatpush.msra.mxu0 %v706
        %768 = vmatpush.msra.mxu0 %v704
        %769 = vmatmul.f32.gmra.mxu0 %v742
        %v770 = vpop.f32.mrf.mxu0
        %v771 = vadd.f32 %v723, %v770
        %772 = vmatmul.f32.gmra.mxu0 %v745
        %v773 = vpop.f32.mrf.mxu0
        %v774 = vadd.f32 %v728, %v773
        %775 = vmatmul.f32.gmra.mxu0 %v748
        %v776 = vpop.f32.mrf.mxu0
        %v777 = vadd.f32 %v733, %v776
        %778 = vmatmul.f32.gmra.mxu0 %v751
        %v779 = vpop.f32.mrf.mxu0
        %v780 = vadd.f32 %v738, %v779
        %781 = vdwg.mxu0
        %782 = vmatpush.msra.mxu0 0.0
        %783 = vmatpush.msra.mxu0 0.0
        %784 = vmatpush.msra.mxu0 0.0
        %785 = vmatpush.msra.mxu0 0.0
        %786 = vmatpush.msra.mxu0 0.0
        %787 = vmatpush.msra.mxu0 0.0
        %788 = vmatpush.msra.mxu0 0.0
        %789 = vmatpush.msra.mxu0 0.0
        %790 = vmatpush.msra.mxu0 0.0
        %791 = vmatpush.msra.mxu0 0.0
        %792 = vmatpush.msra.mxu0 0.0
        %793 = vmatpush.msra.mxu0 0.0
        %794 = vmatpush.msra.mxu0 %v711
        %795 = vmatpush.msra.mxu0 %v709
        %796 = vmatpush.msra.mxu0 %v707
        %797 = vmatpush.msra.mxu0 %v705
        %798 = vmatmul.f32.gmra.mxu0 %v742
        %v799 = vpop.f32.mrf.mxu0
        %v800 = vadd.f32 %v723, %v799
        %801 = vmatmul.f32.gmra.mxu0 %v745
        %v802 = vpop.f32.mrf.mxu0
        %v803 = vadd.f32 %v728, %v802
        %804 = vmatmul.f32.gmra.mxu0 %v748
        %v805 = vpop.f32.mrf.mxu0
        %v806 = vadd.f32 %v733, %v805
        %807 = vmatmul.f32.gmra.mxu0 %v751
        %v808 = vpop.f32.mrf.mxu0
        %v809 = vadd.f32 %v738, %v808
        %810 = vdwg.mxu0
        %vm811 = vcmp.gt.f32.partialorder %v771, 0.0
        %vm812 = vcmp.gt.f32.partialorder %v800, 0.0
        %vm813 = vcmp.gt.f32.partialorder %v774, 0.0
        %vm814 = vcmp.gt.f32.partialorder %v803, 0.0
        %vm815 = vcmp.gt.f32.partialorder %v777, 0.0
        %vm816 = vcmp.gt.f32.partialorder %v806, 0.0
        %vm817 = vcmp.gt.f32.partialorder %v780, 0.0
        %vm818 = vcmp.gt.f32.partialorder %v809, 0.0
        %v819 = vmul.f32 %v771, 0.01
        %v820 = vmul.f32 %v800, 0.01
        %v821 = vmul.f32 %v774, 0.01
        %v822 = vmul.f32 %v803, 0.01
        %v823 = vmul.f32 %v777, 0.01
        %v824 = vmul.f32 %v806, 0.01
        %v825 = vmul.f32 %v780, 0.01
        %v826 = vmul.f32 %v809, 0.01
        %v827 = vsel %vm811, %v771, %v819
        %v828 = vsel %vm812, %v800, %v820
        %v829 = vsel %vm813, %v774, %v821
        %v830 = vsel %vm814, %v803, %v822
        %v831 = vsel %vm815, %v777, %v823
        %v832 = vsel %vm816, %v806, %v824
        %v833 = vsel %vm817, %v780, %v825
        %v834 = vsel %vm818, %v809, %v826
        %v835 = vld [vmem:[%s7] sm:$0xf]
        %v836 = vld [vmem:[%s8] sm:$0xf]
        %838 = vset.pattern.permute.xlu0 0
        %839 = vperm.xlu0 %838, %v836
        %v840 = vpop.permute.xlu0 %839
        %v843 = vsel %vm740, %v835, 0
        %845 = vmatpush.msra.mxu0 0.0
        %846 = vmatpush.msra.mxu0 0.0
        %847 = vmatpush.msra.mxu0 0.0
        %848 = vmatpush.msra.mxu0 0.0
        %849 = vmatpush.msra.mxu0 0.0
        %850 = vmatpush.msra.mxu0 0.0
        %851 = vmatpush.msra.mxu0 0.0
        %852 = vmatpush.msra.mxu0 0.0
        %853 = vmatpush.msra.mxu0 0.0
        %854 = vmatpush.msra.mxu0 0.0
        %855 = vmatpush.msra.mxu0 0.0
        %856 = vmatpush.msra.mxu0 0.0
        %857 = vmatpush.msra.mxu0 %v833
        %858 = vmatpush.msra.mxu0 %v831
        %859 = vmatpush.msra.mxu0 %v829
        %860 = vmatpush.msra.mxu0 %v827
        %861 = vmatmul.f32.gmra.mxu0 %v843
        %v862 = vpop.f32.mrf.mxu0
        %v863 = vadd.f32 %v840, %v862
        %864 = vdwg.mxu0
        %865 = vmatpush.msra.mxu0 0.0
        %866 = vmatpush.msra.mxu0 0.0
        %867 = vmatpush.msra.mxu0 0.0
        %868 = vmatpush.msra.mxu0 0.0
        %869 = vmatpush.msra.mxu0 0.0
        %870 = vmatpush.msra.mxu0 0.0
        %871 = vmatpush.msra.mxu0 0.0
        %872 = vmatpush.msra.mxu0 0.0
        %873 = vmatpush.msra.mxu0 0.0
        %874 = vmatpush.msra.mxu0 0.0
        %875 = vmatpush.msra.mxu0 0.0
        %876 = vmatpush.msra.mxu0 0.0
        %877 = vmatpush.msra.mxu0 %v834
        %878 = vmatpush.msra.mxu0 %v832
        %879 = vmatpush.msra.mxu0 %v830
        %880 = vmatpush.msra.mxu0 %v828
        %881 = vmatmul.f32.gmra.mxu0 %v843
        %v882 = vpop.f32.mrf.mxu0
        %v883 = vadd.f32 %v840, %v882
        %884 = vdwg.mxu0
        %v887 = vrot.slane %v883, 4
        %vm888 = vcmask 1043456
        %v889 = vsel %vm888, %v863, %v887
        %891 = vst [vmem:[%s566] sm:$0xff] %v889
        %p892 = scmp.eq.s32.totalorder %s33, 0
        // Predicated region
        $region81: #{flame_generator_forward.1} parent=71 // pred_check
          %p893 = pneg %p892
        $region82: #{flame_generator_forward.1} parent=71 // pred_check_branch
          %895 = sbr.rel (%p893) target = $region84
        $region83: #{flame_generator_forward.1} parent=71 // pred_region
          %v896 = vld [vmem:[%s551] sm:$0xf]
          %v897 = vld [vmem:[%s9] sm:$0xff]
          %v898 = vld [vmem:[%s9 + $0x8] sm:$0xff]
          %v899 = vld [vmem:[%s9 + $0x10] sm:$0xff]
          %v900 = vld [vmem:[%s9 + $0x18] sm:$0xff]
          %v901 = vld [vmem:[%s10] sm:$0xff]
          %v902 = vld [vmem:[%s10 + $0x8] sm:$0xff]
          %v903 = vld [vmem:[%s10 + $0x10] sm:$0xff]
          %v904 = vld [vmem:[%s10 + $0x18] sm:$0xff]
          %vm905 = vcmask 31744
          %v907 = vsel %vm905, %v897, 0
          %v910 = vsel %vm905, %v898, 0
          %v913 = vsel %vm905, %v899, 0
          %v916 = vsel %vm905, %v900, 0
          %v919 = vsel %vm888, %v896, 0
          %921 = vmatpush.msra.mxu0 0.0
          %922 = vmatpush.msra.mxu0 0.0
          %923 = vmatpush.msra.mxu0 0.0
          %924 = vmatpush.msra.mxu0 0.0
          %925 = vmatpush.msra.mxu0 0.0
          %926 = vmatpush.msra.mxu0 0.0
          %927 = vmatpush.msra.mxu0 0.0
          %928 = vmatpush.msra.mxu0 0.0
          %929 = vmatpush.msra.mxu0 0.0
          %930 = vmatpush.msra.mxu0 0.0
          %931 = vmatpush.msra.mxu0 0.0
          %932 = vmatpush.msra.mxu0 0.0
          %933 = vmatpush.msra.mxu0 0.0
          %934 = vmatpush.msra.mxu0 0.0
          %935 = vmatpush.msra.mxu0 0.0
          %936 = vmatpush.msra.mxu0 %v919
          %937 = vmatmul.f32.gmra.mxu0 %v907
          %v938 = vpop.f32.mrf.mxu0
          %v939 = vadd.f32 %v901, %v938
          %940 = vmatmul.f32.gmra.mxu0 %v910
          %v941 = vpop.f32.mrf.mxu0
          %v942 = vadd.f32 %v902, %v941
          %943 = vmatmul.f32.gmra.mxu0 %v913
          %v944 = vpop.f32.mrf.mxu0
          %v945 = vadd.f32 %v903, %v944
          %946 = vmatmul.f32.gmra.mxu0 %v916
          %v947 = vpop.f32.mrf.mxu0
          %v948 = vadd.f32 %v904, %v947
          %949 = vdwg.mxu0
          %vm950 = vcmp.gt.f32.partialorder %v939, 0.0
          %vm951 = vcmp.gt.f32.partialorder %v942, 0.0
          %vm952 = vcmp.gt.f32.partialorder %v945, 0.0
          %vm953 = vcmp.gt.f32.partialorder %v948, 0.0
          %v954 = vmul.f32 %v939, 0.01
          %v955 = vmul.f32 %v942, 0.01
          %v956 = vmul.f32 %v945, 0.01
          %v957 = vmul.f32 %v948, 0.01
          %v958 = vsel %vm950, %v939, %v954
          %v959 = vsel %vm951, %v942, %v955
          %v960 = vsel %vm952, %v945, %v956
          %v961 = vsel %vm953, %v948, %v957
          %v962 = vld [vmem:[%s11] sm:$0x3]
          %v963 = vld [vmem:[%s12] sm:$0x3]
          %v965 = vsel %vm740, %v962, 0
          %967 = vmatpush.msra.mxu0 0.0
          %968 = vmatpush.msra.mxu0 0.0
          %969 = vmatpush.msra.mxu0 0.0
          %970 = vmatpush.msra.mxu0 0.0
          %971 = vmatpush.msra.mxu0 0.0
          %972 = vmatpush.msra.mxu0 0.0
          %973 = vmatpush.msra.mxu0 0.0
          %974 = vmatpush.msra.mxu0 0.0
          %975 = vmatpush.msra.mxu0 0.0
          %976 = vmatpush.msra.mxu0 0.0
          %977 = vmatpush.msra.mxu0 0.0
          %978 = vmatpush.msra.mxu0 0.0
          %979 = vmatpush.msra.mxu0 %v961
          %980 = vmatpush.msra.mxu0 %v960
          %981 = vmatpush.msra.mxu0 %v959
          %982 = vmatpush.msra.mxu0 %v958
          %983 = vmatmul.f32.gmra.mxu0 %v965
          %v984 = vpop.f32.mrf.mxu0
          %v985 = vadd.f32 %v963, %v984
          %986 = vdwg.mxu0
          %vm987 = vcmask 1024
          %988 = vst.msk [vmem:[%s571] sm:$0x3] %vm987, %v985
        $region84: #{flame_generator_forward.1} parent=71 // pred_fallthru
          _
        %s989 = smul.u32 2, %s33
        %p990 = scmp.lt.s32.totalorder %s32, 1
        %s991 = scalar_select %p990, %s32, 1
        %p992 = scmp.lt.s32.totalorder %s989, 1
        %s993 = scalar_select %p992, %s989, 1
        %s994 = smul.addr %s991, 2
        %s995 = sadd.s32 %s993, %s994
        %s996 = smul.addr %s995, 4
        %s997 = scalar_lea.vmem %s13, %s996
        %p998 = scmp.lt.s32.totalorder %s32, 1
        %s999 = scalar_select %p998, %s32, 1
        %s1000 = smul.addr %s999, 2
        %s1001 = scalar_lea.vmem %s14, %s1000
        // Predicated region
        $region85: #{flame_generator_forward.1} parent=71 // pred_check
          %p1002 = pneg %p348
        $region86: #{flame_generator_forward.1} parent=71 // pred_check_branch
          %1004 = sbr.rel (%p1002) target = $region88
        $region87: #{flame_generator_forward.1} parent=71 // pred_region
          %s1005 = smul.u32 2, %s33
        $region88: #{flame_generator_forward.1} parent=71 // pred_fallthru
          _
        // Predicated region
        $region89: #{flame_generator_forward.1} parent=71 // pred_check
          %p1006 = pneg %p374
        $region90: #{flame_generator_forward.1} parent=71 // pred_check_branch
          %1008 = sbr.rel (%p1006) target = $region92
        $region91: #{flame_generator_forward.1} parent=71 // pred_region
          _
        $region92: #{flame_generator_forward.1} parent=71 // pred_fallthru
          _
      $region72: #{flame_generator_forward.1} parent=5 // pred_fallthru
        _
      %p1009 = scmp.le.s32.totalorder 2, %s23
      // Predicated region
      $region93: #{flame_generator_forward.1} parent=5 // pred_check
        %p1010 = pneg %p1009
      $region94: #{flame_generator_forward.1} parent=5 // pred_check_branch
        %1012 = sbr.rel (%p1010) target = $region96
      $region95: #{flame_generator_forward.1} parent=5 // pred_region
        %s1013 = ssub.s32 %s23, 2
        // Predicated region
        $region97: #{flame_generator_forward.1} parent=95 // pred_check
          %p1014 = pneg %p354
        $region98: #{flame_generator_forward.1} parent=95 // pred_check_branch
          %1016 = sbr.rel (%p1014) target = $region100
        $region99: #{flame_generator_forward.1} parent=95 // pred_region
          %s1017 = smul.u32 2, %s35
          %p1018 = scmp.lt.s32.totalorder %s34, 1
          %s1019 = scalar_select %p1018, %s34, 1
          %p1020 = scmp.lt.s32.totalorder %s1017, 1
          %s1021 = scalar_select %p1020, %s1017, 1
          %s1022 = smul.addr %s1019, 2
          %s1023 = sadd.s32 %s1021, %s1022
          %s1024 = smul.addr %s1023, 4
          %s1025 = scalar_lea.vmem %s13, %s1024
        $region100: #{flame_generator_forward.1} parent=95 // pred_fallthru
          _
        // Predicated region
        $region101: #{flame_generator_forward.1} parent=95 // pred_check
          %p1026 = pneg %p380
        $region102: #{flame_generator_forward.1} parent=95 // pred_check_branch
          %1028 = sbr.rel (%p1026) target = $region104
        $region103: #{flame_generator_forward.1} parent=95 // pred_region
          %p1029 = scmp.lt.s32.totalorder %s34, 1
          %s1030 = scalar_select %p1029, %s34, 1
          %s1031 = smul.addr %s1030, 2
          %s1032 = scalar_lea.vmem %s14, %s1031
        $region104: #{flame_generator_forward.1} parent=95 // pred_fallthru
          _
      $region96: #{flame_generator_forward.1} parent=5 // pred_fallthru
        _
    $region6: #{flame_generator_forward.1} parent=1 // loop_footer
      %s27 = sadd.s32 1, %s23
    $region7: #{flame_generator_forward.1} parent=1 // loop_footer_branch
      %22 = sbr.rel target = $region3
    $region8: #{flame_generator_forward.1} parent=1 // loop_exit
      _
    %1033 = vsyncpa [#allocation3], 1
    %s1034 = scalar_lea.sflag [#allocation3], 1
    %1035 = vsyncpa %s1034, 1
    %1036 = vsyncpa [#allocation5], 1

</llo_original>
